<compile_context>
chip_gen: v7x
topology: tpu7x:2x2x1
jax: 0.10.0
libtpu: 0.0.40
codegen_flags: <defaults>
</compile_context>

<pallas_src>
import functools

import jax
import jax.numpy as jnp
from jax import lax
from jax.experimental import pallas as pl
from jax.experimental.pallas import tpu as pltpu


def _round_up(x, m):
    return (x + m - 1) // m * m


def _cdiv(a, b):
    return -(-a // b)


# ----------------------------------------------------------------------------
# Pallas kernel: weighted spatial mean -> projection -> bias -> activation
# ----------------------------------------------------------------------------
def _head_kernel(*refs, act, has_audio):
    if has_audio:
        vis_ref, sw_ref, wv_ref, aud_ref, wa_ref, b_ref, o_ref = refs
    else:
        vis_ref, sw_ref, wv_ref, b_ref, o_ref = refs

    # Channels-first visual block, exactly as produced upstream (no transpose
    # or recast pre-pass).  Weighted spatial mean over H*W (the lane axis):
    # this collapses AvgPool3d(stride=1) + Linear + mean_{H'W'} into one
    # reduce because all three ops are linear.
    x = vis_ref[...]                                   # (Cv, tile_t, HW), stream dtype
    sw = sw_ref[...]                                   # (1, 1, HW), same dtype
    prod = x * sw                                      # VPU, stays in stream dtype
    vis_red = jnp.sum(prod.astype(jnp.float32), axis=-1)   # (Cv, tile_t), f32 accum

    # Only the HW-times-smaller reduced tensor is transposed / downcast.
    vis_red_t = jnp.transpose(vis_red).astype(wv_ref.dtype)     # (tile_t, Cv) bf16
    logits = jnp.dot(vis_red_t, wv_ref[...],
                     preferred_element_type=jnp.float32)        # (tile_t, Kpad) f32
    if has_audio:
        logits = logits + jnp.dot(aud_ref[...], wa_ref[...],
                                  preferred_element_type=jnp.float32)
    logits = logits + b_ref[...]                       # f32 bias (1, Kpad) broadcasts

    if act == "softmax":
        m = jnp.max(logits, axis=-1, keepdims=True)
        e = jnp.exp(logits - m)                        # padded cols (-1e30 bias) -> 0
        s = jnp.sum(e, axis=-1, keepdims=True)
        out = e * pl.reciprocal(s, approx=True)        # EUP slot; ~1e-3 rel err.
        # (Use approx=False if bitwise-close parity with f32 softmax is needed.)
    elif act == "sigmoid":
        out = jax.nn.sigmoid(logits)
    else:
        out = logits
    o_ref[...] = out.astype(o_ref.dtype)


# ----------------------------------------------------------------------------
# Generation-aware sizing
# ----------------------------------------------------------------------------
def _vmem_capacity_bytes():
    """Physical VMEM per core; conservative (v7x) default if the query fails."""
    try:
        info = pltpu.get_tpu_info()
        for name in ("vmem_capacity_bytes", "vmem_size_bytes", "vmem_bytes"):
            v = getattr(info, name, None)
            if v:
                return int(v)
    except Exception:
        pass
    return 64 * 1024 * 1024


def _choose_tile_t(T, n_batch, frame_bytes, budget):
    """Frames per grid step: full T when it fits (longest contiguous DMA runs),
    else the largest multiple of 8 under the per-buffer budget, shrunk if
    needed so the grid has >= ~4 steps (v7x: 2 TCs x double buffering)."""
    if T <= 8 or T * frame_bytes <= budget:
        tile = T
    else:
        tile = max(8, min(T, (budget // max(frame_bytes, 1)) // 8 * 8))
    min_steps = 4
    if tile > 8 and n_batch * _cdiv(T, tile) < min_steps:
        per_batch = _cdiv(min_steps, n_batch)
        tile = max(8, min(tile, _round_up(_cdiv(T, per_batch), 8)))
    return tile


# ----------------------------------------------------------------------------
# pallas_call wrapper
# ----------------------------------------------------------------------------
def projection_head(vis, aud, sw, w_vis, w_aud, b, *, act, num_classes):
    """vis: (N, Cv, T, HW) channels-first, streamed in its own dtype;
    aud: (N, T, Ca) or None; sw: (1, 1, HW) (vis dtype); w_vis: (Cv, K);
    w_aud: (Ca, K) or None; b: (1, K).  Returns (N, T, K) float32."""
    N, Cv, T, HW = vis.shape
    K = num_classes
    Kpad = _round_up(K, 128)                       # lane-dense output stores
    pad_cols = Kpad - K
    bias_pad = -1e30 if act == "softmax" else 0.0  # padded classes -> exp() == 0

    # Weights travel / sit in VMEM as bf16 (half footprint); accumulate in f32.
    w_vis_p = jnp.pad(w_vis.astype(jnp.bfloat16), ((0, 0), (0, pad_cols)))
    b_p = jnp.pad(b.astype(jnp.float32), ((0, 0), (0, pad_cols)),
                  constant_values=bias_pad)

    has_audio = aud is not None
    Ca = aud.shape[-1] if has_audio else 0

    # Generation-aware VMEM budget (v7x: 64 MiB physical, v5e/v6e: 128 MiB).
    vmem_cap = _vmem_capacity_bytes()
    vmem_limit = min(max(32 * 1024 * 1024, vmem_cap // 2), 96 * 1024 * 1024)
    # Reserve 2x (default double-buffered) bf16 weights + bias/audio/output slack.
    fixed = 2 * (Cv + Ca) * Kpad * 2 + 4 * 1024 * 1024
    # Streamed vis buffer appears ~2x (double buffer) + ~1x product temp
    # (+2x f32-cast temp when the stream is bf16) inside the kernel.
    mult = 3 if vis.dtype.itemsize >= 4 else 5
    budget = max(1 * 1024 * 1024, (vmem_limit - fixed) // mult)

    frame_bytes = Cv * _round_up(HW, 128) * vis.dtype.itemsize   # VMEM-padded
    tile_t = _choose_tile_t(T, N, frame_bytes, budget)
    grid = (N, pl.cdiv(T, tile_t))

    in_specs = [
        pl.BlockSpec((None, Cv, tile_t, HW), lambda n, t: (n, 0, t, 0)),  # stream
        pl.BlockSpec((1, 1, HW), lambda n, t: (0, 0, 0)),                 # spatial wgt
        pl.BlockSpec((Cv, Kpad), lambda n, t: (0, 0)),                    # vis weight
    ]
    args = [vis, sw, w_vis_p]
    if has_audio:
        w_aud_p = jnp.pad(w_aud.astype(jnp.bfloat16), ((0, 0), (0, pad_cols)))
        in_specs += [
            pl.BlockSpec((None, tile_t, Ca), lambda n, t: (n, t, 0)),     # audio feats
            pl.BlockSpec((Ca, Kpad), lambda n, t: (0, 0)),                # audio weight
        ]
        args += [aud, w_aud_p]
    in_specs.append(pl.BlockSpec((1, Kpad), lambda n, t: (0, 0)))         # bias
    args.append(b_p)

    kernel = functools.partial(_head_kernel, act=act, has_audio=has_audio)
    out = pl.pallas_call(
        kernel,
        out_shape=jax.ShapeDtypeStruct((N, T, Kpad), jnp.float32),
        grid_spec=pltpu.PrefetchScalarGridSpec(
            num_scalar_prefetch=0,
            grid=grid,
            in_specs=in_specs,
            out_specs=pl.BlockSpec((None, tile_t, Kpad), lambda n, t: (n, t, 0)),
        ),
        compiler_params=pltpu.CompilerParams(
            dimension_semantics=("parallel", "parallel"),
            vmem_limit_bytes=int(vmem_limit)),
    )(*args)
    return out[:, :, :K]


# ----------------------------------------------------------------------------
# Plain-JAX glue reproducing the module's preprocessing
# ----------------------------------------------------------------------------
def _spatial_mean_weights(H, W, kH, kW):
    """Weights s.t. mean over H'W' of AvgPool(kHxkW, stride=1, VALID) equals a
    weighted mean over the original HxW grid.  Shape (H, W), f32, sums to 1."""
    Hp, Wp = H - kH + 1, W - kW + 1
    h = jnp.arange(H)
    w = jnp.arange(W)
    cnt_h = (jnp.minimum(h, Hp - 1) - jnp.maximum(0, h - kH + 1) + 1).astype(jnp.float32)
    cnt_w = (jnp.minimum(w, Wp - 1) - jnp.maximum(0, w - kW + 1) + 1).astype(jnp.float32)
    return cnt_h[:, None] * cnt_w[None, :] / float(Hp * Wp * kH * kW)


def _audio_features(audio, audio_win, T):
    """permute -> mean([3,4]) -> avg_pool1d(win, stride=1, pad=win//2)
    -> interpolate(size=T, mode='nearest').  Returns (N, Ca, T)."""
    a = jnp.transpose(audio, (0, 1, 3, 2, 4))           # (N, Ca, Ta, F, 1)
    a = jnp.mean(a, axis=(3, 4))                        # (N, Ca, Ta)
    pad = audio_win // 2
    a_p = jnp.pad(a, ((0, 0), (0, 0), (pad, pad)))
    L_out = a.shape[2] + 2 * pad - audio_win + 1
    a_pool = sum(a_p[:, :, i:i + L_out] for i in range(audio_win)) / float(audio_win)
    idx = jnp.floor(jnp.arange(T) * (L_out / T)).astype(jnp.int32)
    return a_pool[:, :, idx]                            # (N, Ca, T)


def fully_conv_head_forward(visual, audio, w, b, visual_pool_size, audio_win,
                            act_func="softmax", training=False):
    """visual: (N, Cv, T, H, W) NCTHW, consumed as-is (no transpose / recast);
    audio: (N, Ca, F, Ta, 1) or None; w: (Cv[+Ca], K); b: (1, K)."""
    assert act_func in ("softmax", "sigmoid", "none")
    N, Cv, T, H, W = visual.shape
    if visual_pool_size is None:                 # AdaptiveAvgPool3d((1, 1, 1))
        kT, kH, kW = T, H, W
    else:
        kT, kH, kW = visual_pool_size

    if kT > 1:
        # Temporal part of the stride-1 AvgPool3d, plain JAX (the torch module
        # requires kT == 1 whenever audio is concatenated).
        assert audio is None, "audio path requires temporal pool size 1"
        visual = lax.reduce_window(visual, 0.0, lax.add,
                                   (1, 1, kT, 1, 1), (1, 1, 1, 1, 1),
                                   "VALID") / float(kT)
    Tp = visual.shape[2]

    # Channels-first stream: merging the trailing (H, W) dims is layout-free.
    vis = visual.reshape(N, Cv, Tp, H * W)
    sw = _spatial_mean_weights(H, W, kH, kW).reshape(1, 1, H * W).astype(vis.dtype)

    aud = None
    w_vis, w_aud = w[:Cv], None
    if audio is not None:
        Ca = audio.shape[1]
        a = _audio_features(audio, audio_win, T)                  # (N, Ca, T)
        # Audio features are constant over (H', W'): their spatial mean is the
        # identity, so the (H', W') broadcast is never materialized.  The tiny
        # (N, T, Ca) transpose / bf16 cast is negligible next to the stream.
        aud = jnp.transpose(a, (0, 2, 1)).astype(jnp.bfloat16)    # (N, T, Ca)
        w_aud = w[Cv:Cv + Ca]

    act = act_func if (not training and act_func != "none") else "none"
    return projection_head(vis, aud, sw, w_vis, w_aud, b, act=act,
                           num_classes=w.shape[1])                # (N, T', K)


# ----------------------------------------------------------------------------
# Pure-JAX f32 reference (follows the PyTorch op order exactly)
# ----------------------------------------------------------------------------
def _reference_forward(visual, audio, w, b, visual_pool_size, audio_win,
                       act_func="softmax"):
    N, Cv, T, H, W = visual.shape
    kT, kH, kW = visual_pool_size
    pooled = lax.reduce_window(visual, 0.0, lax.add,
                               (1, 1, kT, kH, kW), (1, 1, 1, 1, 1),
                               "VALID") / float(kT * kH * kW)
    feats = [pooled]
    if audio is not None:
        Ca = audio.shape[1]
        a = _audio_features(audio, audio_win, T)                  # (N, Ca, T)
        a5 = jnp.broadcast_to(a[:, :, :, None, None],
                              (N, Ca, T, pooled.shape[3], pooled.shape[4]))
        feats.append(a5)
    x = jnp.concatenate(feats, axis=1)
    x = jnp.transpose(x, (0, 2, 3, 4, 1))
    x = jnp.einsum("nthwc,ck->nthwk", x, w,
                   precision=lax.Precision.HIGHEST) + b[0]
    x = jnp.mean(x, axis=(2, 3))
    if act_func == "softmax":
        x = jax.nn.softmax(x, axis=-1)
    elif act_func == "sigmoid":
        x = jax.nn.sigmoid(x)
    return x


# ----------------------------------------------------------------------------
# Demo / self-check
# ----------------------------------------------------------------------------
if __name__ == "__main__":
    key = jax.random.PRNGKey(0)
    k1, k2, k3, k4 = jax.random.split(key, 4)

    # Small forward-consistent shapes (PyTorch NCTHW inputs).
    N, T, H, W = 2, 4, 8, 8
    C_vis, C_aud = 8, 8              # dim_in = [8, 8]
    F_aud, T_aud = 6, 12
    num_classes = 16
    audio_win = 3
    visual_pool_size = (1, 2, 2)     # kT == 1 so the audio concat is valid

    visual = jax.random.normal(k1, (N, C_vis, T, H, W), jnp.float32)
    audio = jax.random.normal(k2, (N, C_aud, F_aud, T_aud, 1), jnp.float32)
    w = jax.random.normal(k3, (C_vis + C_aud, num_classes), jnp.float32) * 0.05
    b = jax.random.normal(k4, (1, num_classes), jnp.float32) * 0.05

    out = fully_conv_head_forward(visual, audio, w, b, visual_pool_size,
                                  audio_win, act_func="softmax", training=False)
    out = jax.block_until_ready(out)
    assert out.shape == (N, T, num_classes)

    ref = _reference_forward(visual, audio, w, b, visual_pool_size, audio_win,
                             act_func="softmax")
    err = float(jnp.max(jnp.abs(out - ref)))
    # bf16 weights / audio stream + approx reciprocal vs an exact f32 reference.
    assert err < 1e-2, err

    print("KERNEL_OK")
</pallas_src>

<mosaic_0001>
module attributes {stable_mosaic.version = 11 : i64} {
  func.func @_head_kernel(%arg0: i32, %arg1: i32, %arg2: memref<1x8x4x64xf32, #tpu.memory_space<vmem>>, %arg3: memref<1x1x64xf32, #tpu.memory_space<vmem>>, %arg4: memref<8x128xbf16, #tpu.memory_space<vmem>>, %arg5: memref<1x4x8xbf16, #tpu.memory_space<vmem>>, %arg6: memref<8x128xbf16, #tpu.memory_space<vmem>>, %arg7: memref<1x128xf32, #tpu.memory_space<vmem>>, %arg8: memref<1x4x128xf32, #tpu.memory_space<vmem>>) attributes {dimension_semantics = [#tpu.dimension_semantics<parallel>, #tpu.dimension_semantics<parallel>], iteration_bounds = array<i64: 2, 1>, scalar_prefetch = 0 : i64, scratch_operands = 0 : i64, tpu.core_type = #tpu.core_type<tc>, window_params = [{transform_indices = @transform_0, window_bounds = array<i64: 1, 8, 4, 64>}, {pipeline_mode = #tpu.pipeline_mode<synchronous>, transform_indices = @transform_1, window_bounds = array<i64: 1, 1, 64>}, {pipeline_mode = #tpu.pipeline_mode<synchronous>, transform_indices = @transform_2, window_bounds = array<i64: 8, 128>}, {transform_indices = @transform_3, window_bounds = array<i64: 1, 4, 8>}, {pipeline_mode = #tpu.pipeline_mode<synchronous>, transform_indices = @transform_4, window_bounds = array<i64: 8, 128>}, {pipeline_mode = #tpu.pipeline_mode<synchronous>, transform_indices = @transform_5, window_bounds = array<i64: 1, 128>}, {transform_indices = @transform_6, window_bounds = array<i64: 1, 4, 128>}]} {
    %c0 = arith.constant 0 : index
    %c0_0 = arith.constant 0 : index
    %c0_1 = arith.constant 0 : index
    %c0_2 = arith.constant 0 : index
    %0 = vector.load %arg2[%c0, %c0_0, %c0_1, %c0_2] : memref<1x8x4x64xf32, #tpu.memory_space<vmem>>, vector<1x8x4x64xf32>
    %1 = vector.shape_cast %0 : vector<1x8x4x64xf32> to vector<8x4x64xf32>
    %c0_3 = arith.constant 0 : index
    %c0_4 = arith.constant 0 : index
    %c0_5 = arith.constant 0 : index
    %2 = vector.load %arg3[%c0_3, %c0_4, %c0_5] : memref<1x1x64xf32, #tpu.memory_space<vmem>>, vector<1x1x64xf32>
    %3 = vector.broadcast %2 : vector<1x1x64xf32> to vector<8x4x64xf32>
    %4 = arith.mulf %1, %3 : vector<8x4x64xf32>
    %cst = arith.constant dense<0.000000e+00> : vector<8x4xf32>
    %5 = vector.multi_reduction <add>, %4, %cst [2] : vector<8x4x64xf32> to vector<8x4xf32>
    %6 = tpu.transpose %5, [1, 0] : vector<8x4xf32> -> vector<4x8xf32>
    %7 = arith.truncf %6 : vector<4x8xf32> to vector<4x8xbf16>
    %c0_6 = arith.constant 0 : index
    %c0_7 = arith.constant 0 : index
    %8 = vector.load %arg4[%c0_6, %c0_7] : memref<8x128xbf16, #tpu.memory_space<vmem>>, vector<8x128xbf16>
    %cst_8 = arith.constant dense<0.000000e+00> : vector<4x128xf32>
    %9 = tpu.matmul %7, %8, %cst_8 {dimension_numbers = #tpu.dot_dimension_numbers<[1], [0], [0], [1], [0, 0, 1, 1], [], []>} : vector<4x8xbf16>, vector<8x128xbf16>, vector<4x128xf32> -> vector<4x128xf32>
    %c0_9 = arith.constant 0 : index
    %c0_10 = arith.constant 0 : index
    %c0_11 = arith.constant 0 : index
    %10 = vector.load %arg5[%c0_9, %c0_10, %c0_11] : memref<1x4x8xbf16, #tpu.memory_space<vmem>>, vector<1x4x8xbf16>
    %11 = vector.shape_cast %10 : vector<1x4x8xbf16> to vector<4x8xbf16>
    %c0_12 = arith.constant 0 : index
    %c0_13 = arith.constant 0 : index
    %12 = vector.load %arg6[%c0_12, %c0_13] : memref<8x128xbf16, #tpu.memory_space<vmem>>, vector<8x128xbf16>
    %cst_14 = arith.constant dense<0.000000e+00> : vector<4x128xf32>
    %13 = tpu.matmul %11, %12, %cst_14 {dimension_numbers = #tpu.dot_dimension_numbers<[1], [0], [0], [1], [0, 0, 1, 1], [], []>} : vector<4x8xbf16>, vector<8x128xbf16>, vector<4x128xf32> -> vector<4x128xf32>
    %14 = arith.addf %9, %13 : vector<4x128xf32>
    %c0_15 = arith.constant 0 : index
    %c0_16 = arith.constant 0 : index
    %15 = vector.load %arg7[%c0_15, %c0_16] : memref<1x128xf32, #tpu.memory_space<vmem>>, vector<1x128xf32>
    %16 = vector.broadcast %15 : vector<1x128xf32> to vector<4x128xf32>
    %17 = arith.addf %14, %16 : vector<4x128xf32>
    %cst_17 = arith.constant dense<0xFF800000> : vector<4xf32>
    %18 = vector.multi_reduction <maximumf>, %17, %cst_17 [1] : vector<4x128xf32> to vector<4xf32>
    %19 = vector.shape_cast %18 : vector<4xf32> to vector<4x1xf32>
    %20 = vector.broadcast %19 : vector<4x1xf32> to vector<4x128xf32>
    %21 = arith.subf %17, %20 : vector<4x128xf32>
    %22 = math.exp %21 : vector<4x128xf32>
    %cst_18 = arith.constant dense<0.000000e+00> : vector<4xf32>
    %23 = vector.multi_reduction <add>, %22, %cst_18 [1] : vector<4x128xf32> to vector<4xf32>
    %24 = vector.shape_cast %23 : vector<4xf32> to vector<4x1xf32>
    %25 = tpu.reciprocal %24 {approx = true} : vector<4x1xf32> -> vector<4x1xf32>
    %26 = vector.broadcast %25 : vector<4x1xf32> to vector<4x128xf32>
    %27 = arith.mulf %22, %26 : vector<4x128xf32>
    %c0_19 = arith.constant 0 : index
    %c0_20 = arith.constant 0 : index
    %c0_21 = arith.constant 0 : index
    %28 = vector.load %arg8[%c0_19, %c0_20, %c0_21] : memref<1x4x128xf32, #tpu.memory_space<vmem>>, vector<1x4x128xf32>
    %29 = vector.shape_cast %28 : vector<1x4x128xf32> to vector<4x128xf32>
    %30 = vector.shape_cast %27 : vector<4x128xf32> to vector<1x4x128xf32>
    tpu.vector_store %arg8[%c0_19, %c0_20, %c0_21], %30 {strides = array<i32>} : memref<1x4x128xf32, #tpu.memory_space<vmem>>, vector<1x4x128xf32>,
    return
  }
  func.func @transform_0(%arg0: i32, %arg1: i32) -> (i32, i32, i32, i32) {
    %c0_i32 = arith.constant 0 : i32
    %c0_i32_0 = arith.constant 0 : i32
    %c0_i32_1 = arith.constant 0 : i32
    return %arg0, %c0_i32, %arg1, %c0_i32_0 : i32, i32, i32, i32
  }
  func.func @transform_1(%arg0: i32, %arg1: i32) -> (i32, i32, i32) {
    %c0_i32 = arith.constant 0 : i32
    %c0_i32_0 = arith.constant 0 : i32
    %c0_i32_1 = arith.constant 0 : i32
    %c0_i32_2 = arith.constant 0 : i32
    return %c0_i32, %c0_i32_0, %c0_i32_1 : i32, i32, i32
  }
  func.func @transform_2(%arg0: i32, %arg1: i32) -> (i32, i32) {
    %c0_i32 = arith.constant 0 : i32
    %c0_i32_0 = arith.constant 0 : i32
    %c0_i32_1 = arith.constant 0 : i32
    return %c0_i32, %c0_i32_0 : i32, i32
  }
  func.func @transform_3(%arg0: i32, %arg1: i32) -> (i32, i32, i32) {
    %c0_i32 = arith.constant 0 : i32
    %c0_i32_0 = arith.constant 0 : i32
    return %arg0, %arg1, %c0_i32 : i32, i32, i32
  }
  func.func @transform_4(%arg0: i32, %arg1: i32) -> (i32, i32) {
    %c0_i32 = arith.constant 0 : i32
    %c0_i32_0 = arith.constant 0 : i32
    %c0_i32_1 = arith.constant 0 : i32
    return %c0_i32, %c0_i32_0 : i32, i32
  }
  func.func @transform_5(%arg0: i32, %arg1: i32) -> (i32, i32) {
    %c0_i32 = arith.constant 0 : i32
    %c0_i32_0 = arith.constant 0 : i32
    %c0_i32_1 = arith.constant 0 : i32
    return %c0_i32, %c0_i32_0 : i32, i32
  }
  func.func @transform_6(%arg0: i32, %arg1: i32) -> (i32, i32, i32) {
    %c0_i32 = arith.constant 0 : i32
    %c0_i32_0 = arith.constant 0 : i32
    return %arg0, %arg1, %c0_i32 : i32, i32, i32
  }
}

</mosaic_0001>

<llo_original>
// kernel: tpu_custom_call.1
$region0: #{tpu_custom_call.1}
  #allocation0 [shape = 'u32[]', space=smem, size = 0x4, offset = 0x4, fixed_abs, tag = 'smem constant byte address 0x4 - core index']
  #allocation1 [shape = 'u32[144,128]{1,0:T(1,128)}', space=vmem, size = 0x12000, scoped, tag = 'internal scratch']
  %s0 = inlined_call_operand.hbm [shape: f32[2,8,4,64], index: 0, kind: input, shape index: {}]
  %s1 = inlined_call_operand.vmem [shape: f32[1,1,64], index: 1, kind: input, shape index: {}]
  %s2 = inlined_call_operand.vmem [shape: bf16[8,128], index: 2, kind: input, shape index: {}]
  %s3 = inlined_call_operand.vmem [shape: bf16[2,4,8], index: 3, kind: input, shape index: {}]
  %s4 = inlined_call_operand.vmem [shape: bf16[8,128], index: 4, kind: input, shape index: {}]
  %s5 = inlined_call_operand.vmem [shape: f32[1,128], index: 5, kind: input, shape index: {}]
  %s6 = inlined_call_operand.hbm [shape: f32[2,4,128], index: 6, kind: output, shape index: {}]
  %s7 = sld [smem:[#allocation0]]
  $region61: #{tpu_custom_call.1} parent=0
    _
  %s9 = ssub.s32 1, %s7
  %s10 = scalar_select 0, %s9, %s7
  $region1: #{tpu_custom_call.1} parent=0
    #allocation2 [shape = 'u8[32768]{0}', space=vmem, size = 0x8000, scoped, tag = 'input window, operand 0']
    #allocation3 [shape = 's32[2]{0}', space=sflag, size = 0x8, scoped, tag = 'scoped memory for tpu_custom_call.1']
    #allocation4 [shape = 's32[2]{0}', space=sflag, size = 0x8, scoped, tag = 'scoped memory for tpu_custom_call.1']
    #allocation5 [shape = 'u8[4096]{0}', space=vmem, size = 0x1000, scoped, tag = 'output window, operand 0']
    %11 = vsyncpa [#allocation3], 0
    %s12 = scalar_lea.sflag [#allocation3], 1
    %13 = vsyncpa %s12, 0
    %14 = vsyncpa [#allocation4], 0
    %s15 = scalar_lea.sflag [#allocation4], 1
    %16 = vsyncpa %s15, 0
    loop: start=0, step=1, limit=4
    $region2: #{tpu_custom_call.1} parent=1 // loop_pre_header
      _
    $region3: #{tpu_custom_call.1} parent=1 // loop_header
      %s18 = sphi 0, %s22
      %p19 = scmp.ge.s32.totalorder %s18, 4
      %s25 = sphi 0, %s37
      %s26 = sphi 0, %s33
      %s27 = sphi 0, %s25
      %s28 = sphi 0, %s26
      %s29 = sphi 0, %s27
      %s30 = sphi 0, %s28
      %s42 = sphi 0, %s44
      %s45 = sphi 0, %s42
      %s46 = sphi 0, %s45
      %s62 = sphi 0, %s46
      %s66 = sphi 0, %s66
      %s68 = sphi 0, %s66
      %s69 = sphi 0, %s68
      %s83 = sphi 0, %s69
      %s87 = sphi 0, %s87
      %s89 = sphi 0, %s87
      %s90 = sphi 0, %s89
      %s104 = sphi 0, %s90
      %s112 = sphi 0, %s114
      %s115 = sphi 0, %s112
      %s116 = sphi 0, %s115
      %s132 = sphi 0, %s116
      %s136 = sphi 0, %s136
      %s138 = sphi 0, %s136
      %s139 = sphi 0, %s138
      %s153 = sphi 0, %s139
      %s157 = sphi 0, %s157
      %s159 = sphi 0, %s157
      %s160 = sphi 0, %s159
      %s174 = sphi 0, %s160
      %s182 = sphi 0, %s184
      %s185 = sphi 0, %s182
      %s186 = sphi 0, %s185
      %s202 = sphi 0, %s186
    $region4: #{tpu_custom_call.1} parent=1 // loop_header_branch
      %21 = sbr.rel (%p19) target = $region8
    $region5: #{tpu_custom_call.1} parent=1 // loop_body
      %s23 = ssub.s32 %s18, 1
      %s24 = ssub.s32 %s18, 2
      %s31 = sadd.s32 1, %s26
      %p32 = scmp.ge.s32.totalorder %s31, 1
      %s33 = scalar_select %p32, 0, %s31
      %s34 = sadd.s32 1, %s25
      %s35 = scalar_select %p32, %s34, %s25
      %p36 = scmp.ge.s32.totalorder %s35, 2
      %s37 = scalar_select %p36, 0, %s35
      %s38 = ssub.s32 %s25, %s37
      %s39 = ssub.s32 %s26, %s33
      %s40 = sor.u32 %s38, %s39
      %p41 = scmp.eq.s32.totalorder %s40, 0
      %s43 = sadd.s32 %s42, 1
      %s44 = scalar_select %p41, %s42, %s43
      %p47 = pneg %p41
      %p48 = scmp.eq.s32.totalorder %s18, 1
      %p49 = por %p47, %p48
      %p50 = scmp.ne.s32.totalorder %s42, %s45
      %p51 = scmp.eq.s32.totalorder %s18, 0
      %p52 = por %p50, %p51
      %p53 = scmp.ne.s32.totalorder %s42, %s45
      %p54 = scmp.eq.s32.totalorder %s23, 1
      %p55 = por %p53, %p54
      %p56 = scmp.ne.s32.totalorder %s45, %s46
      %p57 = scmp.eq.s32.totalorder %s23, 0
      %p58 = por %p56, %p57
      %p59 = scmp.ne.s32.totalorder %s45, %s46
      %p60 = scmp.eq.s32.totalorder %s24, 1
      %p61 = por %p59, %p60
      %p63 = scmp.ne.s32.totalorder %s46, %s62
      %p64 = scmp.eq.s32.totalorder %s24, 0
      %p65 = por %p63, %p64
      %s67 = sadd.s32 %s66, 1
      %p70 = scmp.eq.s32.totalorder %s18, 1
      %p71 = scmp.ne.s32.totalorder %s66, %s68
      %p72 = scmp.eq.s32.totalorder %s18, 0
      %p73 = por %p71, %p72
      %p74 = scmp.ne.s32.totalorder %s66, %s68
      %p75 = scmp.eq.s32.totalorder %s23, 1
      %p76 = por %p74, %p75
      %p77 = scmp.ne.s32.totalorder %s68, %s69
      %p78 = scmp.eq.s32.totalorder %s23, 0
      %p79 = por %p77, %p78
      %p80 = scmp.ne.s32.totalorder %s68, %s69
      %p81 = scmp.eq.s32.totalorder %s24, 1
      %p82 = por %p80, %p81
      %p84 = scmp.ne.s32.totalorder %s69, %s83
      %p85 = scmp.eq.s32.totalorder %s24, 0
      %p86 = por %p84, %p85
      %s88 = sadd.s32 %s87, 1
      %p91 = scmp.eq.s32.totalorder %s18, 1
      %p92 = scmp.ne.s32.totalorder %s87, %s89
      %p93 = scmp.eq.s32.totalorder %s18, 0
      %p94 = por %p92, %p93
      %p95 = scmp.ne.s32.totalorder %s87, %s89
      %p96 = scmp.eq.s32.totalorder %s23, 1
      %p97 = por %p95, %p96
      %p98 = scmp.ne.s32.totalorder %s89, %s90
      %p99 = scmp.eq.s32.totalorder %s23, 0
      %p100 = por %p98, %p99
      %p101 = scmp.ne.s32.totalorder %s89, %s90
      %p102 = scmp.eq.s32.totalorder %s24, 1
      %p103 = por %p101, %p102
      %p105 = scmp.ne.s32.totalorder %s90, %s104
      %p106 = scmp.eq.s32.totalorder %s24, 0
      %p107 = por %p105, %p106
      %s108 = ssub.s32 %s25, %s37
      %s109 = ssub.s32 %s26, %s33
      %s110 = sor.u32 %s108, %s109
      %p111 = scmp.eq.s32.totalorder %s110, 0
      %s113 = sadd.s32 %s112, 1
      %s114 = scalar_select %p111, %s112, %s113
      %p117 = pneg %p111
      %p118 = scmp.eq.s32.totalorder %s18, 1
      %p119 = por %p117, %p118
      %p120 = scmp.ne.s32.totalorder %s112, %s115
      %p121 = scmp.eq.s32.totalorder %s18, 0
      %p122 = por %p120, %p121
      %p123 = scmp.ne.s32.totalorder %s112, %s115
      %p124 = scmp.eq.s32.totalorder %s23, 1
      %p125 = por %p123, %p124
      %p126 = scmp.ne.s32.totalorder %s115, %s116
      %p127 = scmp.eq.s32.totalorder %s23, 0
      %p128 = por %p126, %p127
      %p129 = scmp.ne.s32.totalorder %s115, %s116
      %p130 = scmp.eq.s32.totalorder %s24, 1
      %p131 = por %p129, %p130
      %p133 = scmp.ne.s32.totalorder %s116, %s132
      %p134 = scmp.eq.s32.totalorder %s24, 0
      %p135 = por %p133, %p134
      %s137 = sadd.s32 %s136, 1
      %p140 = scmp.eq.s32.totalorder %s18, 1
      %p141 = scmp.ne.s32.totalorder %s136, %s138
      %p142 = scmp.eq.s32.totalorder %s18, 0
      %p143 = por %p141, %p142
      %p144 = scmp.ne.s32.totalorder %s136, %s138
      %p145 = scmp.eq.s32.totalorder %s23, 1
      %p146 = por %p144, %p145
      %p147 = scmp.ne.s32.totalorder %s138, %s139
      %p148 = scmp.eq.s32.totalorder %s23, 0
      %p149 = por %p147, %p148
      %p150 = scmp.ne.s32.totalorder %s138, %s139
      %p151 = scmp.eq.s32.totalorder %s24, 1
      %p152 = por %p150, %p151
      %p154 = scmp.ne.s32.totalorder %s139, %s153
      %p155 = scmp.eq.s32.totalorder %s24, 0
      %p156 = por %p154, %p155
      %s158 = sadd.s32 %s157, 1
      %p161 = scmp.eq.s32.totalorder %s18, 1
      %p162 = scmp.ne.s32.totalorder %s157, %s159
      %p163 = scmp.eq.s32.totalorder %s18, 0
      %p164 = por %p162, %p163
      %p165 = scmp.ne.s32.totalorder %s157, %s159
      %p166 = scmp.eq.s32.totalorder %s23, 1
      %p167 = por %p165, %p166
      %p168 = scmp.ne.s32.totalorder %s159, %s160
      %p169 = scmp.eq.s32.totalorder %s23, 0
      %p170 = por %p168, %p169
      %p171 = scmp.ne.s32.totalorder %s159, %s160
      %p172 = scmp.eq.s32.totalorder %s24, 1
      %p173 = por %p171, %p172
      %p175 = scmp.ne.s32.totalorder %s160, %s174
      %p176 = scmp.eq.s32.totalorder %s24, 0
      %p177 = por %p175, %p176
      %s178 = ssub.s32 %s25, %s37
      %s179 = ssub.s32 %s26, %s33
      %s180 = sor.u32 %s178, %s179
      %p181 = scmp.eq.s32.totalorder %s180, 0
      %s183 = sadd.s32 %s182, 1
      %s184 = scalar_select %p181, %s182, %s183
      %p187 = pneg %p181
      %p188 = scmp.eq.s32.totalorder %s18, 1
      %p189 = por %p187, %p188
      %p190 = scmp.ne.s32.totalorder %s182, %s185
      %p191 = scmp.eq.s32.totalorder %s18, 0
      %p192 = por %p190, %p191
      %p193 = scmp.ne.s32.totalorder %s182, %s185
      %p194 = scmp.eq.s32.totalorder %s23, 1
      %p195 = por %p193, %p194
      %p196 = scmp.ne.s32.totalorder %s185, %s186
      %p197 = scmp.eq.s32.totalorder %s23, 0
      %p198 = por %p196, %p197
      %p199 = scmp.ne.s32.totalorder %s185, %s186
      %p200 = scmp.eq.s32.totalorder %s24, 1
      %p201 = por %p199, %p200
      %p203 = scmp.ne.s32.totalorder %s186, %s202
      %p204 = scmp.eq.s32.totalorder %s24, 0
      %p205 = por %p203, %p204
      %p206 = scmp.le.s32.totalorder 1, %s18
      %p207 = scmp.lt.s32.totalorder %s18, 3
      %p208 = pnand %p206, %p207
      %p209 = pneg %p208
      // Predicated region
      $region9: #{tpu_custom_call.1} parent=5 // pred_check
        _
      $region10: #{tpu_custom_call.1} parent=5 // pred_check_branch
        %211 = sbr.rel (%p208) target = $region12
      $region11: #{tpu_custom_call.1} parent=5 // pred_region
        %s212 = ssub.s32 %s18, 1
        // Predicated region
        $region13: #{tpu_custom_call.1} parent=11 // pred_check
          %p213 = pneg %p79
        $region14: #{tpu_custom_call.1} parent=11 // pred_check_branch
          %215 = sbr.rel (%p213) target = $region16
        $region15: #{tpu_custom_call.1} parent=11 // pred_region
          _
        $region16: #{tpu_custom_call.1} parent=11 // pred_fallthru
          _
        // Predicated region
        $region17: #{tpu_custom_call.1} parent=11 // pred_check
          %p216 = pneg %p100
        $region18: #{tpu_custom_call.1} parent=11 // pred_check_branch
          %218 = sbr.rel (%p216) target = $region20
        $region19: #{tpu_custom_call.1} parent=11 // pred_region
          _
        $region20: #{tpu_custom_call.1} parent=11 // pred_fallthru
          _
        // Predicated region
        $region21: #{tpu_custom_call.1} parent=11 // pred_check
          %p219 = pneg %p149
        $region22: #{tpu_custom_call.1} parent=11 // pred_check_branch
          %221 = sbr.rel (%p219) target = $region24
        $region23: #{tpu_custom_call.1} parent=11 // pred_region
          _
        $region24: #{tpu_custom_call.1} parent=11 // pred_fallthru
          _
        // Predicated region
        $region25: #{tpu_custom_call.1} parent=11 // pred_check
          %p222 = pneg %p170
        $region26: #{tpu_custom_call.1} parent=11 // pred_check_branch
          %224 = sbr.rel (%p222) target = $region28
        $region27: #{tpu_custom_call.1} parent=11 // pred_region
          _
        $region28: #{tpu_custom_call.1} parent=11 // pred_fallthru
          _
      $region12: #{tpu_custom_call.1} parent=5 // pred_fallthru
        _
      %p225 = scmp.lt.s32.totalorder %s18, 2
      // Predicated region
      $region29: #{tpu_custom_call.1} parent=5 // pred_check
        %p226 = pneg %p225
      $region30: #{tpu_custom_call.1} parent=5 // pred_check_branch
        %228 = sbr.rel (%p226) target = $region32
      $region31: #{tpu_custom_call.1} parent=5 // pred_region
        // Predicated region
        $region33: #{tpu_custom_call.1} parent=31 // pred_check
          %p229 = pneg %p52
        $region34: #{tpu_custom_call.1} parent=31 // pred_check_branch
          %231 = sbr.rel (%p229) target = $region36
        $region35: #{tpu_custom_call.1} parent=31 // pred_region
          %s232 = sand.u32 %s42, 1
          %s233 = scalar_lea.sflag [#allocation3], %s232
          %s234 = sand.u32 %s42, 1
          %s235 = smul.addr %s234, 32
          %s236 = scalar_lea.vmem [#allocation2], %s235
          %s238 = ssub.s32 512, 512
          %239 = vsyncadd %s233, %s238
          %s240 = smul.addr %s25, 8
          %s241 = sadd.s32 %s26, %s240
          %s242 = smul.addr %s241, 64
          %s243 = scalar_lea.hbm %s0, %s242
          %s244 = sshll.u32 %s236, 4
          %s245 = int_to_ptr.vmem [resolvable:$true] %s244
          %250 = dma.hbm_to_vmem [thread:$0]  %s243, 512, %s245, %s233, 64, 64, 4
        $region36: #{tpu_custom_call.1} parent=31 // pred_fallthru
          _
        // Predicated region
        $region37: #{tpu_custom_call.1} parent=31 // pred_check
          %p251 = pneg %p122
        $region38: #{tpu_custom_call.1} parent=31 // pred_check_branch
          %253 = sbr.rel (%p251) target = $region40
        $region39: #{tpu_custom_call.1} parent=31 // pred_region
          %p254 = scmp.lt.s32.totalorder %s25, 1
          %s255 = scalar_select %p254, %s25, 1
          %p256 = scmp.lt.s32.totalorder %s26, 0
          %s257 = scalar_select %p256, %s26, 0
          %s258 = sadd.s32 %s257, %s255
          %s259 = smul.addr %s258, 2
          %s260 = scalar_lea.vmem %s3, %s259
        $region40: #{tpu_custom_call.1} parent=31 // pred_fallthru
          _
      $region32: #{tpu_custom_call.1} parent=5 // pred_fallthru
        _
      %p261 = scmp.le.s32.totalorder 1, %s18
      %p262 = scmp.lt.s32.totalorder %s18, 3
      %p263 = pnand %p261, %p262
      %p264 = pneg %p263
      // Predicated region
      $region41: #{tpu_custom_call.1} parent=5 // pred_check
        _
      $region42: #{tpu_custom_call.1} parent=5 // pred_check_branch
        %266 = sbr.rel (%p263) target = $region44
      $region43: #{tpu_custom_call.1} parent=5 // pred_region
        %s267 = ssub.s32 %s18, 1
        %s268 = sand.u32 %s45, 1
        %s269 = scalar_lea.sflag [#allocation3], %s268
        %s270 = sand.u32 %s45, 1
        %s271 = smul.addr %s270, 32
        %s272 = scalar_lea.vmem [#allocation2], %s271
        // Predicated region
        $region45: #{tpu_custom_call.1} parent=43 // pred_check
          %p273 = pneg %p58
        $region46: #{tpu_custom_call.1} parent=43 // pred_check_branch
          %275 = sbr.rel (%p273) target = $region48
        $region47: #{tpu_custom_call.1} parent=43 // pred_region
          %276 = dma.done %s269, 512
        $region48: #{tpu_custom_call.1} parent=43 // pred_fallthru
          _
        %s277 = sand.u32 %s45, 1
        %s278 = scalar_lea.sflag [#allocation3], %s277
        %s279 = sand.u32 %s45, 1
        %s280 = smul.addr %s279, 32
        %s281 = scalar_lea.vmem [#allocation2], %s280
        %p282 = pneg %p58
        %p283 = pneg %p55
        %p284 = pneg %p79
        %p285 = pneg %p76
        %p286 = pneg %p100
        %p287 = pneg %p97
        %p288 = scmp.lt.s32.totalorder %s27, 1
        %s289 = scalar_select %p288, %s27, 1
        %p290 = scmp.lt.s32.totalorder %s28, 0
        %s291 = scalar_select %p290, %s28, 0
        %s292 = sadd.s32 %s291, %s289
        %s293 = smul.addr %s292, 2
        %s294 = scalar_lea.vmem %s3, %s293
        %p295 = pneg %p128
        %p296 = pneg %p125
        %p297 = pneg %p149
        %p298 = pneg %p146
        %p299 = pneg %p170
        %p300 = pneg %p167
        %p301 = pneg %p198
        %p302 = pneg %p195
        %s303 = sand.u32 %s185, 1
        %s304 = scalar_lea.sflag [#allocation4], %s303
        %s305 = sand.u32 %s185, 1
        %s306 = smul.addr %s305, 4
        %s307 = scalar_lea.vmem [#allocation5], %s306
        %p308 = scmp.lt.s32.totalorder %s27, 1
        %s309 = scalar_select %p308, %s27, 1
        %p310 = scmp.lt.s32.totalorder %s28, 0
        %s311 = scalar_select %p310, %s28, 0
        %s312 = sadd.s32 %s311, %s309
        %s313 = smul.addr %s312, 2
        %s314 = scalar_lea.vmem %s3, %s313
        %v316 = vld [vmem:[%s272] sm:$0xf]
        %v317 = vld [vmem:[%s272 + $0x4] sm:$0xf]
        %v318 = vld [vmem:[%s272 + $0x8] sm:$0xf]
        %v319 = vld [vmem:[%s272 + $0xc] sm:$0xf]
        %v320 = vld [vmem:[%s272 + $0x10] sm:$0xf]
        %v321 = vld [vmem:[%s272 + $0x14] sm:$0xf]
        %v322 = vld [vmem:[%s272 + $0x18] sm:$0xf]
        %v323 = vld [vmem:[%s272 + $0x1c] sm:$0xf]
        %v324 = vld [vmem:[%s1] sm:$0x1]
        %v326 = vlaneseq
        %v327 = vshrl.u32 %v326, 7
        %v328 = vsub.s32 0, %v327
        %v329 = vrot.slane %v324, %v328
        %v331 = vmul.f32 %v316, %v329
        %v332 = vmul.f32 %v317, %v329
        %v333 = vmul.f32 %v318, %v329
        %v334 = vmul.f32 %v319, %v329
        %v335 = vmul.f32 %v320, %v329
        %v336 = vmul.f32 %v321, %v329
        %v337 = vmul.f32 %v322, %v329
        %v338 = vmul.f32 %v323, %v329
        %vm339 = vcmask 519168
        %v340 = vsel %vm339, %v331, 0.0
        %341 = vadd.xlane.f32.xlu0 %v340
        %v342 = vpop.xlane.xlu0 %341
        %v343 = vsel %vm339, %v332, 0.0
        %344 = vadd.xlane.f32.xlu0 %v343
        %v345 = vpop.xlane.xlu0 %344
        %v346 = vsel %vm339, %v333, 0.0
        %347 = vadd.xlane.f32.xlu0 %v346
        %v348 = vpop.xlane.xlu0 %347
        %v349 = vsel %vm339, %v334, 0.0
        %350 = vadd.xlane.f32.xlu0 %v349
        %v351 = vpop.xlane.xlu0 %350
        %v352 = vsel %vm339, %v335, 0.0
        %353 = vadd.xlane.f32.xlu0 %v352
        %v354 = vpop.xlane.xlu0 %353
        %v355 = vsel %vm339, %v336, 0.0
        %356 = vadd.xlane.f32.xlu0 %v355
        %v357 = vpop.xlane.xlu0 %356
        %v358 = vsel %vm339, %v337, 0.0
        %359 = vadd.xlane.f32.xlu0 %v358
        %v360 = vpop.xlane.xlu0 %359
        %v361 = vsel %vm339, %v338, 0.0
        %362 = vadd.xlane.f32.xlu0 %v361
        %v363 = vpop.xlane.xlu0 %362
        %v372 = vlaneseq
        %v373 = vand.u32 %v372, 127
        %v374 = vlaneseq
        %v375 = vshrl.u32 %v374, 7
        %v376 = vsub.s32 %v373, %v375
        %v377 = vrot.slane %v342, %v376
        %v378 = vlaneseq
        %v379 = vshrl.u32 %v378, 7
        %v380 = vsub.s32 %v373, %v379
        %v381 = vrot.slane %v345, %v380
        %v382 = vlaneseq
        %v383 = vshrl.u32 %v382, 7
        %v384 = vsub.s32 %v373, %v383
        %v385 = vrot.slane %v348, %v384
        %v386 = vlaneseq
        %v387 = vshrl.u32 %v386, 7
        %v388 = vsub.s32 %v373, %v387
        %v389 = vrot.slane %v351, %v388
        %v390 = vlaneseq
        %v391 = vshrl.u32 %v390, 7
        %v392 = vsub.s32 %v373, %v391
        %v393 = vrot.slane %v354, %v392
        %v394 = vlaneseq
        %v395 = vshrl.u32 %v394, 7
        %v396 = vsub.s32 %v373, %v395
        %v397 = vrot.slane %v357, %v396
        %v398 = vlaneseq
        %v399 = vshrl.u32 %v398, 7
        %v400 = vsub.s32 %v373, %v399
        %v401 = vrot.slane %v360, %v400
        %v402 = vlaneseq
        %v403 = vshrl.u32 %v402, 7
        %v404 = vsub.s32 %v373, %v403
        %v405 = vrot.slane %v363, %v404
        %vm406 = vcmask 1041409
        %v407 = vsel %vm406, %v381, %v377
        %vm408 = vcmask 1042434
        %v409 = vsel %vm408, %v385, %v407
        %vm410 = vcmask 1043459
        %v411 = vsel %vm410, %v389, %v409
        %vm412 = vcmask 1044484
        %v413 = vsel %vm412, %v393, %v411
        %vm414 = vcmask 1045509
        %v415 = vsel %vm414, %v397, %v413
        %vm416 = vcmask 1046534
        %v417 = vsel %vm416, %v401, %v415
        %vm418 = vcmask 1047559
        %v419 = vsel %vm418, %v405, %v417
        %421 = vxpose.xlu0.b32.start [1/16] %v419, 128
        %422 = vxpose.xlu0.b32.cont [2/16] 0.0, 128
        %423 = vxpose.xlu0.b32.cont [3/16] 0.0, 128
        %424 = vxpose.xlu0.b32.cont [4/16] 0.0, 128
        %425 = vxpose.xlu0.b32.cont [5/16] 0.0, 128
        %426 = vxpose.xlu0.b32.cont [6/16] 0.0, 128
        %427 = vxpose.xlu0.b32.cont [7/16] 0.0, 128
        %428 = vxpose.xlu0.b32.cont [8/16] 0.0, 128
        %429 = vxpose.xlu0.b32.cont [9/16] 0.0, 128
        %430 = vxpose.xlu0.b32.cont [10/16] 0.0, 128
        %431 = vxpose.xlu0.b32.cont [11/16] 0.0, 128
        %432 = vxpose.xlu0.b32.cont [12/16] 0.0, 128
        %433 = vxpose.xlu0.b32.cont [13/16] 0.0, 128
        %434 = vxpose.xlu0.b32.cont [14/16] 0.0, 128
        %435 = vxpose.xlu0.b32.cont [15/16] 0.0, 128
        %436 = vxpose.xlu0.b32.end [16/16] 0.0, 128
        %v437 = vpop.trf.xlu0
        %v438 = vpop.trf.xlu0
        %v439 = vpop.trf.xlu0
        %v440 = vpop.trf.xlu0
        %v441 = vpop.trf.xlu0
        %v442 = vpop.trf.xlu0
        %v443 = vpop.trf.xlu0
        %v444 = vpop.trf.xlu0
        %v445 = vpop.trf.xlu0
        %v446 = vpop.trf.xlu0
        %v447 = vpop.trf.xlu0
        %v448 = vpop.trf.xlu0
        %v449 = vpop.trf.xlu0
        %v450 = vpop.trf.xlu0
        %v451 = vpop.trf.xlu0
        %v452 = vpop.trf.xlu0
        %v453 = vpack.c.bf16 %v437, %v437
        %v454 = vld [vmem:[%s2] sm:$0xf]
        %v455 = vld [vmem:[%s314] sm:$0x3]
        %v456 = vld [vmem:[%s4] sm:$0xf]
        %vm457 = vcmask 64512
        %v459 = vsel %vm457, %v455, 0
        %vm461 = vcmask 1043456
        %v463 = vsel %vm461, %v456, 0
        %465 = vmatprep.subr.bf16.mxu0 0
        %466 = vmatpush1.bf16.msra.mxu0 %v463
        %467 = vmatprep.subr.bf16.mxu0 0
        %468 = vmatpush1.bf16.msra.mxu0 0
        %469 = vmatprep.subr.bf16.mxu0 0
        %470 = vmatpush1.bf16.msra.mxu0 0
        %471 = vmatprep.subr.bf16.mxu0 0
        %472 = vmatpush1.bf16.msra.mxu0 0
        %473 = vmatprep.subr.bf16.mxu0 0
        %474 = vmatpush1.bf16.msra.mxu0 0
        %475 = vmatprep.subr.bf16.mxu0 0
        %476 = vmatpush1.bf16.msra.mxu0 0
        %477 = vmatprep.subr.bf16.mxu0 0
        %478 = vmatpush1.bf16.msra.mxu0 0
        %479 = vmatprep.subr.bf16.mxu0 0
        %480 = vmatpush1.bf16.msra.mxu0 0
        %481 = vmatprep.subr.bf16.mxu0 0
        %482 = vmatpush1.bf16.msra.mxu0 0
        %483 = vmatprep.subr.bf16.mxu0 0
        %484 = vmatpush1.bf16.msra.mxu0 0
        %485 = vmatprep.subr.bf16.mxu0 0
        %486 = vmatpush1.bf16.msra.mxu0 0
        %487 = vmatprep.subr.bf16.mxu0 0
        %488 = vmatpush1.bf16.msra.mxu0 0
        %489 = vmatprep.subr.bf16.mxu0 0
        %490 = vmatpush1.bf16.msra.mxu0 0
        %491 = vmatprep.subr.bf16.mxu0 0
        %492 = vmatpush1.bf16.msra.mxu0 0
        %493 = vmatprep.subr.bf16.mxu0 0
        %494 = vmatpush1.bf16.msra.mxu0 0
        %495 = vmatprep.subr.bf16.mxu0 0
        %496 = vmatpush1.bf16.msra.mxu0 0
        %497 = vmatprep.mubr.bf16.mxu0 0
        %498 = vmatmul.mubr.bf16.gmra.mrb[0].mxu0 %v459
        %v499 = vpop.f32.mrb[0].mxu0
        %v500 = vadd.f32 0.0, %v499
        %v501 = vpop.f32.mrb[0].mxu0
        %v502 = vpop.f32.mrb[0].mxu0
        %v503 = vpop.f32.mrb[0].mxu0
        %504 = vdwg.mxu0
        %v506 = vsel %vm457, %v453, 0
        %v509 = vsel %vm461, %v454, 0
        %511 = vmatprep.subr.bf16.mxu0 0
        %512 = vmatpush1.bf16.msra.mxu0 %v509
        %513 = vmatprep.subr.bf16.mxu0 0
        %514 = vmatpush1.bf16.msra.mxu0 0
        %515 = vmatprep.subr.bf16.mxu0 0
        %516 = vmatpush1.bf16.msra.mxu0 0
        %517 = vmatprep.subr.bf16.mxu0 0
        %518 = vmatpush1.bf16.msra.mxu0 0
        %519 = vmatprep.subr.bf16.mxu0 0
        %520 = vmatpush1.bf16.msra.mxu0 0
        %521 = vmatprep.subr.bf16.mxu0 0
        %522 = vmatpush1.bf16.msra.mxu0 0
        %523 = vmatprep.subr.bf16.mxu0 0
        %524 = vmatpush1.bf16.msra.mxu0 0
        %525 = vmatprep.subr.bf16.mxu0 0
        %526 = vmatpush1.bf16.msra.mxu0 0
        %527 = vmatprep.subr.bf16.mxu0 0
        %528 = vmatpush1.bf16.msra.mxu0 0
        %529 = vmatprep.subr.bf16.mxu0 0
        %530 = vmatpush1.bf16.msra.mxu0 0
        %531 = vmatprep.subr.bf16.mxu0 0
        %532 = vmatpush1.bf16.msra.mxu0 0
        %533 = vmatprep.subr.bf16.mxu0 0
        %534 = vmatpush1.bf16.msra.mxu0 0
        %535 = vmatprep.subr.bf16.mxu0 0
        %536 = vmatpush1.bf16.msra.mxu0 0
        %537 = vmatprep.subr.bf16.mxu0 0
        %538 = vmatpush1.bf16.msra.mxu0 0
        %539 = vmatprep.subr.bf16.mxu0 0
        %540 = vmatpush1.bf16.msra.mxu0 0
        %541 = vmatprep.subr.bf16.mxu0 0
        %542 = vmatpush1.bf16.msra.mxu0 0
        %543 = vmatprep.mubr.bf16.mxu0 0
        %544 = vmatmul.mubr.bf16.gmra.mrb[0].mxu0 %v506
        %v545 = vpop.f32.mrb[0].mxu0
        %v546 = vadd.f32 %v500, %v545
        %v547 = vpop.f32.mrb[0].mxu0
        %v548 = vpop.f32.mrb[0].mxu0
        %v549 = vpop.f32.mrb[0].mxu0
        %550 = vdwg.mxu0
        %v551 = vld [vmem:[%s5] sm:$0x1]
        %v553 = vlaneseq
        %v554 = vshrl.u32 %v553, 7
        %v555 = vsub.s32 0, %v554
        %v556 = vrot.slane %v551, %v555
        %v558 = vadd.f32 %v546, %v556
        %v559 = vsel %vm461, %v558, -inf
        %560 = vmax.xlane.f32.xlu0 %v559
        %v561 = vpop.xlane.xlu0 %560
        %v562 = vsub.f32 %v558, %v561
        %v563 = vmul.f32 %v562, 1.442695
        %v564 = vpow.pop %v563
        %v565 = vsel %vm461, %v564, 0.0
        %566 = vadd.xlane.f32.xlu0 %v565
        %v567 = vpop.xlane.xlu0 %566
        %v568 = vrcp.pop %v567
        %v569 = vmul.f32 %v564, %v568
        %570 = vst [vmem:[%s307] sm:$0xf] %v569
        %s571 = sand.u32 %s185, 1
        %s572 = scalar_lea.sflag [#allocation4], %s571
        %s573 = sand.u32 %s185, 1
        %s574 = smul.addr %s573, 4
        %s575 = scalar_lea.vmem [#allocation5], %s574
        // Predicated region
        $region49: #{tpu_custom_call.1} parent=43 // pred_check
          %p576 = pneg %p195
        $region50: #{tpu_custom_call.1} parent=43 // pred_check_branch
          %578 = sbr.rel (%p576) target = $region52
        $region51: #{tpu_custom_call.1} parent=43 // pred_region
          %s580 = ssub.s32 64, 64
          %581 = vsyncadd %s572, %s580
          %s582 = sadd.s32 %s28, %s27
          %s583 = smul.addr %s582, 64
          %s584 = scalar_lea.hbm %s6, %s583
          %s586 = sshll.u32 %s575, 4
          %s587 = int_to_ptr.vmem [resolvable:$true] %s586
          %589 = dma.vmem_to_hbm [thread:$0]  %s587, 64, %s584, %s572
        $region52: #{tpu_custom_call.1} parent=43 // pred_fallthru
          _
      $region44: #{tpu_custom_call.1} parent=5 // pred_fallthru
        _
      %p590 = scmp.le.s32.totalorder 2, %s18
      // Predicated region
      $region53: #{tpu_custom_call.1} parent=5 // pred_check
        %p591 = pneg %p590
      $region54: #{tpu_custom_call.1} parent=5 // pred_check_branch
        %593 = sbr.rel (%p591) target = $region56
      $region55: #{tpu_custom_call.1} parent=5 // pred_region
        %s594 = ssub.s32 %s18, 2
        // Predicated region
        $region57: #{tpu_custom_call.1} parent=55 // pred_check
          %p595 = pneg %p201
        $region58: #{tpu_custom_call.1} parent=55 // pred_check_branch
          %597 = sbr.rel (%p595) target = $region60
        $region59: #{tpu_custom_call.1} parent=55 // pred_region
          %s598 = sand.u32 %s186, 1
          %s599 = scalar_lea.sflag [#allocation4], %s598
          %s600 = sand.u32 %s186, 1
          %s601 = smul.addr %s600, 4
          %s602 = scalar_lea.vmem [#allocation5], %s601
          %603 = dma.done %s599, 64
        $region60: #{tpu_custom_call.1} parent=55 // pred_fallthru
          _
      $region56: #{tpu_custom_call.1} parent=5 // pred_fallthru
        _
    $region6: #{tpu_custom_call.1} parent=1 // loop_footer
      %s22 = sadd.s32 1, %s18
    $region7: #{tpu_custom_call.1} parent=1 // loop_footer_branch
      %17 = sbr.rel target = $region3
    $region8: #{tpu_custom_call.1} parent=1 // loop_exit
      _
    %604 = vsyncpa [#allocation3], 1
    %s605 = scalar_lea.sflag [#allocation3], 1
    %606 = vsyncpa %s605, 1
    %607 = vsyncpa [#allocation4], 1
    %s608 = scalar_lea.sflag [#allocation4], 1
    %609 = vsyncpa %s608, 1

</llo_original>
